<compile_context>
chip_gen: v5e
topology: v5e:2x2
jax: 0.10.0
libtpu: 0.0.40
codegen_flags: <defaults>
</compile_context>

<pallas_src>
import math

import jax
import jax.numpy as jnp
from jax.experimental import pallas as pl
from jax.experimental.pallas import tpu as pltpu


def make_pe_table(d_model: int, max_len: int = 5000, dtype=jnp.float32):
    """Deterministic sinusoidal table, identical math to the PyTorch __init__."""
    position = jnp.arange(max_len, dtype=jnp.float32)[:, None]               # (L, 1)
    div_term = jnp.exp(
        jnp.arange(0, d_model, 2, dtype=jnp.float32) * (-math.log(10000.0) / d_model)
    )                                                                         # (D/2,)
    ang = position * div_term                                                 # (L, D/2)
    pe = jnp.zeros((max_len, d_model), dtype=jnp.float32)
    pe = pe.at[:, 0::2].set(jnp.sin(ang))
    pe = pe.at[:, 1::2].set(jnp.cos(ang))
    return pe.astype(dtype)                                                   # (L, D)


def _lsr32(v, k: int):
    # Logical shift right emulated with arithmetic shift + mask (int32-safe,
    # lowers to plain VPU shift/and on TPU and works under CPU interpret).
    return (v >> k) & jnp.int32((1 << (32 - k)) - 1)


def _fmix32(h):
    # murmur3 finalizer: good avalanche, pure int32 VPU ops.
    h = h ^ _lsr32(h, 16)
    h = h * jnp.int32(-2048144789)    # 0x85EBCA6B
    h = h ^ _lsr32(h, 13)
    h = h * jnp.int32(-1028477387)    # 0xC2B2AE35
    h = h ^ _lsr32(h, 16)
    return h


def positional_encoding(x, pe_table, *, dropout_p: float = 0.1,
                        training: bool = True, seed: int = 0):
    """x: (B, S, D) float array. Returns dropout(x + pe[:B].transpose(0,1))."""
    B, S, D = x.shape
    # Faithful to the reference: pe[:x.size(0)] broadcast over dim 1 needs B == S.
    assert B == S, "reference forward broadcasts pe[:x.size(0)] over dim 1 -> needs B == S"

    dtype = x.dtype
    itemsize = jnp.dtype(dtype).itemsize
    N = S * D                                              # flattened (seq*feature) width

    # Lane-dense 2D views (row-major reshapes are free).
    x2 = x.reshape(B, N)
    pe2 = pe_table[:S].astype(dtype).reshape(1, N)         # pre-cast: halves pe DMA for bf16

    # ---- tile sizing: big contiguous blocks (~2 MiB) for HBM-roofline DMA ----
    LANE = 128
    SUB = {4: 8, 2: 16, 1: 32}.get(itemsize, 8)            # sublane packing per dtype
    TARGET = 2 * 1024 * 1024                               # ~2 MiB per x block
    # (fits comfortably in the scoped-VMEM defaults on v5e/v6e/v7x even with
    #  double-buffered x/out blocks plus the pe column chunk)

    if N * itemsize <= TARGET:
        TC = N                                             # full width: always a legal block dim
    else:
        TC = max(LANE, (TARGET // itemsize) // LANE * LANE)  # multiple of 128

    rows_target = max(1, TARGET // (TC * itemsize))
    if rows_target >= B:
        TB = B
    else:
        TB = min(B, max(SUB, (rows_target // SUB) * SUB))

    grid = (pl.cdiv(B, TB), pl.cdiv(N, TC))

    apply_dropout = bool(training) and float(dropout_p) > 0.0
    keep_scale = 1.0 / (1.0 - float(dropout_p)) if apply_dropout else 1.0
    # drop iff 31 hash bits < threshold (probability quantized to 2^-31)
    threshold = min(int(round(float(dropout_p) * (1 << 31))), (1 << 31) - 1)

    seed_arr = jnp.array([seed], dtype=jnp.int32)

    def kernel(seed_ref, x_ref, pe_ref, o_ref):
        y = x_ref[...] + pe_ref[...]                       # (TB, TC) + (1, TC) broadcast add
        if apply_dropout:
            i = pl.program_id(0)
            j = pl.program_id(1)
            rows = jax.lax.broadcasted_iota(jnp.int32, y.shape, 0) + i * TB
            cols = jax.lax.broadcasted_iota(jnp.int32, y.shape, 1) + j * TC
            idx = rows * jnp.int32(N) + cols               # global element counter
            h = _fmix32(idx ^ (seed_ref[0] + jnp.int32(-1640531527)))   # + golden-ratio salt
            keep = (h & jnp.int32(0x7FFFFFFF)) >= jnp.int32(threshold)
            # single select with the scale folded in (no float PRNG math on the VPU)
            y = jnp.where(keep, y * jnp.asarray(keep_scale, y.dtype), jnp.zeros_like(y))
        o_ref[...] = y.astype(o_ref.dtype)

    out2 = pl.pallas_call(
        kernel,
        out_shape=jax.ShapeDtypeStruct((B, N), dtype),
        grid=grid,
        in_specs=[
            pl.BlockSpec(memory_space=pltpu.MemorySpace.SMEM),   # seed scalar
            pl.BlockSpec((TB, TC), lambda i, j: (i, j)),         # x row/col chunk
            pl.BlockSpec((1, TC), lambda i, j: (0, j)),          # pe col chunk (reused over rows)
        ],
        out_specs=pl.BlockSpec((TB, TC), lambda i, j: (i, j)),
        compiler_params=pltpu.CompilerParams(
            dimension_semantics=("parallel", "parallel")),       # lets v7x shard over 2 TCs
        cost_estimate=pl.CostEstimate(
            flops=int(B * N * (8 if apply_dropout else 1)),
            transcendentals=0,
            bytes_accessed=int((2 * B * N + N) * itemsize)),
    )(seed_arr, x2, pe2)

    return out2.reshape(B, S, D)


if __name__ == "__main__":
    d_model = 32
    max_len = 64
    B = S = 8        # B == S required by the reference's pe[:x.size(0)] broadcasting

    key = jax.random.PRNGKey(0)
    x = jax.random.normal(key, (B, S, d_model), dtype=jnp.float32)
    pe_table = make_pe_table(d_model, max_len)

    # Eval mode (dropout = identity): exact check vs pure-JAX reference.
    out_eval = jax.block_until_ready(
        positional_encoding(x, pe_table, dropout_p=0.1, training=False))
    ref = x + pe_table[:S][None, :, :]
    assert out_eval.shape == (B, S, d_model)
    assert jnp.allclose(out_eval, ref, atol=1e-6), "eval-mode mismatch"

    # Training mode: every output element must be 0 (dropped) or (x+pe)/keep_prob.
    p = 0.1
    out_train = jax.block_until_ready(
        positional_encoding(x, pe_table, dropout_p=p, training=True, seed=123))
    assert out_train.shape == (B, S, d_model)
    scaled = ref / (1.0 - p)
    ok = jnp.logical_or(out_train == 0.0,
                        jnp.isclose(out_train, scaled, atol=1e-5, rtol=1e-5))
    assert bool(jnp.all(ok)), "training-mode dropout values inconsistent"

    print("KERNEL_OK")
</pallas_src>

<mosaic_0001>
module attributes {stable_mosaic.version = 11 : i64} {
  func.func @kernel(%arg0: i32, %arg1: i32, %arg2: memref<1xi32, #tpu.memory_space<smem>>, %arg3: memref<8x256xf32, #tpu.memory_space<vmem>>, %arg4: memref<1x256xf32, #tpu.memory_space<vmem>>, %arg5: memref<8x256xf32, #tpu.memory_space<vmem>>) attributes {dimension_semantics = [#tpu.dimension_semantics<parallel>, #tpu.dimension_semantics<parallel>], iteration_bounds = array<i64: 1, 1>, scalar_prefetch = 0 : i64, scratch_operands = 0 : i64, tpu.core_type = #tpu.core_type<tc>, window_params = [{transform_indices = @transform_0, window_bounds = array<i64: 1>}, {transform_indices = @transform_1, window_bounds = array<i64: 8, 256>}, {transform_indices = @transform_2, window_bounds = array<i64: 1, 256>}, {transform_indices = @transform_3, window_bounds = array<i64: 8, 256>}]} {
    %c0 = arith.constant 0 : index
    %c0_0 = arith.constant 0 : index
    %0 = vector.load %arg3[%c0, %c0_0] : memref<8x256xf32, #tpu.memory_space<vmem>>, vector<8x256xf32>
    %c0_1 = arith.constant 0 : index
    %c0_2 = arith.constant 0 : index
    %1 = vector.load %arg4[%c0_1, %c0_2] : memref<1x256xf32, #tpu.memory_space<vmem>>, vector<1x256xf32>
    %2 = vector.broadcast %1 : vector<1x256xf32> to vector<8x256xf32>
    %3 = arith.addf %0, %2 : vector<8x256xf32>
    %c0_3 = arith.constant 0 : index
    %c0_4 = arith.constant 0 : index
    %4 = vector.load %arg5[%c0_3, %c0_4] : memref<8x256xf32, #tpu.memory_space<vmem>>, vector<8x256xf32>
    tpu.vector_store %arg5[%c0_3, %c0_4], %3 {strides = array<i32>} : memref<8x256xf32, #tpu.memory_space<vmem>>, vector<8x256xf32>,
    return
  }
  func.func @transform_0(%arg0: i32, %arg1: i32) -> i32 {
    %c0_i32 = arith.constant 0 : i32
    %c0_i32_0 = arith.constant 0 : i32
    return %c0_i32 : i32
  }
  func.func @transform_1(%arg0: i32, %arg1: i32) -> (i32, i32) {
    %c0_i32 = arith.constant 0 : i32
    return %arg0, %arg1 : i32, i32
  }
  func.func @transform_2(%arg0: i32, %arg1: i32) -> (i32, i32) {
    %c0_i32 = arith.constant 0 : i32
    %c0_i32_0 = arith.constant 0 : i32
    return %c0_i32, %arg1 : i32, i32
  }
  func.func @transform_3(%arg0: i32, %arg1: i32) -> (i32, i32) {
    %c0_i32 = arith.constant 0 : i32
    return %arg0, %arg1 : i32, i32
  }
}

</mosaic_0001>

<llo_original>
// kernel: tpu_custom_call.1
$region0: #{tpu_custom_call.1}
  #allocation0 [shape = 'u32[]', space=smem, size = 0x4, offset = 0x4, fixed_abs, tag = 'smem constant byte address 0x4 - core index']
  #allocation1 [shape = 'u32[72,128]{1,0:T(1,128)}', space=vmem, size = 0x9000, scoped, tag = 'internal scratch']
  #allocation2 [shape = 's32[1]{0:T(128)S(6)}', space=smem, size = 0x200, scoped, tag = 'scoped memory for tpu_custom_call.1']
  %s0 = inlined_call_operand.<no memory space> [shape: s32[1], index: 0, kind: input, shape index: {}]
  %s1 = inlined_call_operand.hbm [shape: f32[8,256], index: 1, kind: input, shape index: {}]
  %s2 = inlined_call_operand.vmem [shape: f32[1,256], index: 2, kind: input, shape index: {}]
  %s3 = inlined_call_operand.hbm [shape: f32[8,256], index: 3, kind: output, shape index: {}]
  %s4 = sld [smem:[#allocation0]]
  $region26: #{tpu_custom_call.1} parent=0
    _
  %s6 = ssub.s32 1, %s4
  %s7 = scalar_select 0, %s6, %s4
  %8 = sst [smem:[#allocation2]] %s0
  $region1: #{tpu_custom_call.1} parent=0
    #allocation3 [shape = 'u8[8192]{0}', space=vmem, size = 0x2000, scoped, tag = 'input window, operand 1, single buffered']
    #allocation4 [shape = 's32[1]{0}', space=sflag, size = 0x4, scoped, tag = 'scoped memory for tpu_custom_call.1']
    #allocation5 [shape = 's32[1]{0}', space=sflag, size = 0x4, scoped, tag = 'scoped memory for tpu_custom_call.1']
    #allocation6 [shape = 'u8[8192]{0}', space=vmem, size = 0x2000, scoped, tag = 'output window, operand 0, single buffered']
    %9 = vsyncpa [#allocation4], 0
    %10 = vsyncpa [#allocation5], 0
    // Predicated region
    $region2: #{tpu_custom_call.1} parent=1 // pred_check
      _
    $region3: #{tpu_custom_call.1} parent=1 // pred_check_branch
      %12 = sbr.rel (0) target = $region5
    $region4: #{tpu_custom_call.1} parent=1 // pred_region
      _
    $region5: #{tpu_custom_call.1} parent=1 // pred_fallthru
      _
    // Predicated region
    $region6: #{tpu_custom_call.1} parent=1 // pred_check
      _
    $region7: #{tpu_custom_call.1} parent=1 // pred_check_branch
      %14 = sbr.rel (0) target = $region9
    $region8: #{tpu_custom_call.1} parent=1 // pred_region
      %16 = vsyncadd [#allocation4], 0
      %s18 = sshll.u32 %s1, 4
      %s19 = int_to_ptr.hbm [resolvable:$true] %s18
      %s20 = sshll.u32 [#allocation3], 4
      %s21 = int_to_ptr.vmem [resolvable:$true] %s20
      %23 = dma.hbm_to_vmem [thread:$0]  %s19, 256, %s21, [#allocation4]
    $region9: #{tpu_custom_call.1} parent=1 // pred_fallthru
      _
    // Predicated region
    $region10: #{tpu_custom_call.1} parent=1 // pred_check
      _
    $region11: #{tpu_custom_call.1} parent=1 // pred_check_branch
      %25 = sbr.rel (0) target = $region13
    $region12: #{tpu_custom_call.1} parent=1 // pred_region
      _
    $region13: #{tpu_custom_call.1} parent=1 // pred_fallthru
      _
    // Predicated region
    $region14: #{tpu_custom_call.1} parent=1 // pred_check
      _
    $region15: #{tpu_custom_call.1} parent=1 // pred_check_branch
      %27 = sbr.rel (0) target = $region17
    $region16: #{tpu_custom_call.1} parent=1 // pred_region
      %29 = dma.done [#allocation4], 256
    $region17: #{tpu_custom_call.1} parent=1 // pred_fallthru
      _
    %v30 = vld [vmem:[#allocation3] sm:$0xff]
    %v31 = vld [vmem:[#allocation3 + $0x8] sm:$0xff]
    %v32 = vld [vmem:[%s2] sm:$0x3]
    %v34 = vperm.slane %v32, 0
    %v35 = vperm.slane %v32, 1
    %v38 = vadd.f32 %v30, %v34
    %v39 = vadd.f32 %v31, %v35
    %40 = vst [vmem:[#allocation6] sm:$0xff] %v38
    %41 = vst [vmem:[#allocation6 + $0x8] sm:$0xff] %v39
    // Predicated region
    $region18: #{tpu_custom_call.1} parent=1 // pred_check
      _
    $region19: #{tpu_custom_call.1} parent=1 // pred_check_branch
      %43 = sbr.rel (0) target = $region21
    $region20: #{tpu_custom_call.1} parent=1 // pred_region
      %45 = vsyncadd [#allocation5], 0
      %s47 = sshll.u32 [#allocation6], 4
      %s48 = int_to_ptr.vmem [resolvable:$true] %s47
      %s49 = sshll.u32 %s3, 4
      %s50 = int_to_ptr.hbm [resolvable:$true] %s49
      %52 = dma.vmem_to_hbm [thread:$0]  %s48, 256, %s50, [#allocation5]
    $region21: #{tpu_custom_call.1} parent=1 // pred_fallthru
      _
    // Predicated region
    $region22: #{tpu_custom_call.1} parent=1 // pred_check
      _
    $region23: #{tpu_custom_call.1} parent=1 // pred_check_branch
      %54 = sbr.rel (0) target = $region25
    $region24: #{tpu_custom_call.1} parent=1 // pred_region
      %56 = dma.done [#allocation5], 256
    $region25: #{tpu_custom_call.1} parent=1 // pred_fallthru
      _
    %57 = vsyncpa [#allocation4], 1
    %58 = vsyncpa [#allocation5], 1

</llo_original>
